<compile_context>
chip_gen: v7x
topology: tpu7x:2x2x1
jax: 0.10.0
libtpu: 0.0.40
codegen_flags: <defaults>
</compile_context>

<pallas_src>
import jax
import jax.numpy as jnp
from jax.experimental import pallas as pl
from jax.experimental.pallas import tpu as pltpu


def _identity_dma_kernel(x_hbm, o_hbm, sem):
    # Whole-array HBM -> HBM copy: one DMA descriptor, no VMEM staging.
    cp = pltpu.make_async_copy(x_hbm, o_hbm, sem)
    cp.start()
    cp.wait()


def straight_through(x: jax.Array) -> jax.Array:
    """Identity forward pass (StraightThrough.forward) via a single HBM->HBM DMA.

    Accepts any shape/dtype; returns an array identical to the input.
    (A caller that does not need the Pallas anchor should just use `x`.)
    """
    return pl.pallas_call(
        _identity_dma_kernel,
        out_shape=jax.ShapeDtypeStruct(x.shape, x.dtype),
        in_specs=[pl.BlockSpec(memory_space=pl.ANY)],   # stay in HBM, no auto-DMA
        out_specs=pl.BlockSpec(memory_space=pl.ANY),    # written directly by the DMA
        scratch_shapes=[pltpu.SemaphoreType.DMA],
        compiler_params=pltpu.CompilerParams(has_side_effects=True),
    )(x)


if __name__ == "__main__":
    key = jax.random.PRNGKey(0)

    # Small NCHW input consistent with how StraightThrough is used
    # (activation pass-through in quantized conv layers).
    x = jax.random.normal(key, (2, 4, 16, 16), dtype=jnp.float32)
    y = straight_through(x)
    jax.block_until_ready(y)
    assert y.shape == x.shape and y.dtype == x.dtype
    assert bool(jnp.all(y == x))

    # Sub-32-bit dtype path: no padding / sublane fiddling needed since the
    # copy is a pure HBM->HBM DMA of the original buffer.
    xb = jax.random.normal(key, (2, 4, 16, 16)).astype(jnp.bfloat16)
    yb = straight_through(xb)
    jax.block_until_ready(yb)
    assert yb.shape == xb.shape and yb.dtype == xb.dtype
    assert bool(jnp.all(yb == xb))

    print("KERNEL_OK")
</pallas_src>

<mosaic_0001>
module attributes {stable_mosaic.version = 11 : i64} {
  func.func @_identity_dma_kernel(%arg0: memref<2x4x16x16xf32, #tpu.memory_space<any>>, %arg1: memref<2x4x16x16xf32, #tpu.memory_space<any>>, %arg2: memref<!tpu.dma_semaphore, #tpu.memory_space<semaphore_mem>>) attributes {dimension_semantics = [], scalar_prefetch = 0 : i64, scratch_operands = 1 : i64, tpu.core_type = #tpu.core_type<tc>} {
    tpu.enqueue_dma source(%arg0 : memref<2x4x16x16xf32, #tpu.memory_space<any>>) target(%arg1 : memref<2x4x16x16xf32, #tpu.memory_space<any>>) target_semaphore(%arg2 : memref<!tpu.dma_semaphore, #tpu.memory_space<semaphore_mem>>)
    tpu.wait_dma2 semaphore(%arg2 : memref<!tpu.dma_semaphore, #tpu.memory_space<semaphore_mem>>) src(%arg0 : memref<2x4x16x16xf32, #tpu.memory_space<any>>) dst(%arg1 : memref<2x4x16x16xf32, #tpu.memory_space<any>>)
    return
  }
}

</mosaic_0001>

<llo_original>
// kernel: tpu_custom_call.1
$region0: #{tpu_custom_call.1}
  #allocation0 [shape = 'u32[]', space=smem, size = 0x4, offset = 0x4, fixed_abs, tag = 'smem constant byte address 0x4 - core index']
  #allocation1 [shape = 'u32[144,128]{1,0:T(1,128)}', space=vmem, size = 0x12000, scoped, tag = 'internal scratch']
  #allocation2 [shape = 's32[1]{0}', space=sflag, size = 0x4, scoped, tag = 'scratch operand']
  #allocation3 [shape = 's32[]', space=sflag, size = 0x4, offset = 0, fixed_abs, tag = 'sflag constant byte address 0x0 - dummy sync flag']
  #allocation4 [shape = 'u32[0]{0}', space=smem, size = 0, offset = 0, fixed_abs, tag = 'smem constant byte address 0x0 - null']
  %s0 = inlined_call_operand.hbm [shape: f32[2,4,16,16], index: 0, kind: input, shape index: {}]
  %s1 = inlined_call_operand.hbm [shape: f32[2,4,16,16], index: 1, kind: output, shape index: {}]
  %s2 = sld [smem:[#allocation0]]
  $region2: #{tpu_custom_call.1} parent=0
    _
  %s4 = ssub.s32 1, %s2
  %s5 = scalar_select 0, %s4, %s2
  %s7 = sshll.u32 1, 14
  %s8 = sxor.u32 4294967295, %s7
  %s11 = sshll.u32 3, 24
  %s12 = sxor.u32 4294967295, %s11
  %s13 = sand.u32 0, %s12
  %s15 = sor.u32 %s13, 0
  %18 = dma.general %s0, 2048, %s1, [#allocation2], [#allocation3], [#allocation4], %s15, 0
  %s19 = smul.u32 2, 4
  %s20 = smul.u32 %s19, 16
  %s21 = smul.u32 %s20, 1
  %s22 = sshll.u32 %s21, 4
  %23 = dma.done [#allocation2], %s22
  %24 = vsyncmov [#allocation2]
  %s25 = vpop.sfrf %24
  %p26 = scmp.eq.s32.totalorder %s25, 0
  %p27 = pneg %p26
  %29 = shalt.err (%p27)

</llo_original>
